<compile_context>
chip_gen: v7x
topology: tpu7x:2x2x1
jax: 0.10.0
libtpu: 0.0.40
codegen_flags: <defaults>
</compile_context>

<pallas_src>
import functools

import jax
import jax.numpy as jnp
from jax.experimental import pallas as pl
from jax.experimental.pallas import tpu as pltpu

drop_prob = 0.6   # TODO(synk): dropout is identity at inference; not applied.
hid_dim = 16      # C
inp_dim = 64      # E
n_heads = 4       # H
context_length = 8


def _mha_kernel(x_ref, w_ref, bias_ref, o_ref, *, num_heads, head_dim):
    """All batches and all heads in one gridless invocation.

    x_ref:    (B*T, E)      f32   tokens, batch and time flattened
    w_ref:    (H, E, 3*C)   bf16  per-head fused [Wq*C^-0.5 | Wk | Wv]
    bias_ref: (B*T, B*T)    f32   additive mask: 0 for within-sequence causal
                                  positions, -1e30 elsewhere (incl. cross-seq)
    o_ref:    (B*T, H*C)    f32   == torch.cat(head outputs, dim=-1), flat
    """
    BT, E = x_ref.shape
    H, C = num_heads, head_dim

    # Head-batched fused QKV projection: bf16 operands, f32 accumulation.
    x_b = jnp.broadcast_to(x_ref[...].astype(jnp.bfloat16)[None], (H, BT, E))
    qkv = jnp.einsum('hme,hef->hmf', x_b, w_ref[...],
                     preferred_element_type=jnp.float32)        # (H, BT, 3C)
    q = qkv[:, :, 0 * C:1 * C].astype(jnp.bfloat16)   # scale folded into Wq
    k = qkv[:, :, 1 * C:2 * C].astype(jnp.bfloat16)
    v = qkv[:, :, 2 * C:3 * C].astype(jnp.bfloat16)

    # Scores for every head at once; the additive bias enforces causality and
    # blocks attention across different sequences of the flattened batch.
    s = jnp.einsum('hmc,hnc->hmn', q, k,
                   preferred_element_type=jnp.float32)          # (H, BT, BT)
    s = s + bias_ref[...]                                       # bcast over H

    # Softmax in f32 (v5e has no bf16 VPU/EUP); denominator on the EUP slot.
    m = jnp.max(s, axis=-1, keepdims=True)
    p = jnp.exp(s - m)
    denom = jnp.sum(p, axis=-1, keepdims=True)
    p = p * pl.reciprocal(denom, approx=True)

    o = jnp.einsum('hmn,hnc->hmc', p.astype(jnp.bfloat16), v,
                   preferred_element_type=jnp.float32)          # (H, BT, C)

    # Single head->lane merge (the torch.cat(dim=-1)) and one full-ref store.
    o_ref[...] = jnp.concatenate([o[h] for h in range(H)],
                                 axis=-1).astype(o_ref.dtype)


def fuse_head_weights(wq, wk, wv):
    """Module-build-time constant: per-head fused [Wq*scale | Wk | Wv], bf16.

    wq/wk/wv: (H, E, C), already transposed so q = x @ wq[h] (nn.Linear).
    Computed once when the module is constructed, not on the per-call path.
    """
    H, E, C = wq.shape
    return jnp.concatenate([wq * (C ** -0.5), wk, wv],
                           axis=-1).astype(jnp.bfloat16)        # (H, E, 3C)


def attention_bias(batch, seq_len):
    """Module-build-time additive mask over the flattened B*T token rows."""
    bt = batch * seq_len
    r = jnp.arange(bt)
    same_seq = (r[:, None] // seq_len) == (r[None, :] // seq_len)
    causal = (r[None, :] % seq_len) <= (r[:, None] % seq_len)
    # Large finite negative (not -inf) so a fully-masked row could never NaN.
    return jnp.where(same_seq & causal, 0.0, -1e30).astype(jnp.float32)


def multi_head_attention(x, w_fused, bias):
    """x: (B, T, E) f32 -> (B, T, H*C) f32."""
    B, T, E = x.shape
    H, _, C3 = w_fused.shape
    C = C3 // 3
    kernel = functools.partial(_mha_kernel, num_heads=H, head_dim=C)
    out = pl.pallas_call(
        kernel,
        out_shape=jax.ShapeDtypeStruct((B * T, H * C), x.dtype),
        # Gridless: the whole workload (~60 KiB) is VMEM-resident on every
        # TPU generation (well under even v7x's 64 MiB), so inputs/weights/
        # output are fetched exactly once and there is no per-step grid/DMA
        # overhead. Revisit with a flash-style grid + dimension_semantics if
        # scaled to real GPT-2 dimensions.
        in_specs=[
            pl.BlockSpec(memory_space=pltpu.MemorySpace.VMEM),
            pl.BlockSpec(memory_space=pltpu.MemorySpace.VMEM),
            pl.BlockSpec(memory_space=pltpu.MemorySpace.VMEM),
        ],
        out_specs=pl.BlockSpec(memory_space=pltpu.MemorySpace.VMEM),
    )(x.reshape(B * T, E), w_fused, bias)
    # Row-major (B*T, H*C) -> (B, T, H*C) is a free metadata reshape.
    return out.reshape(B, T, H * C)


def _reference(x, wq, wk, wv):
    """Pure-JAX f32 reference for correctness check."""
    B, T, E = x.shape
    H, _, C = wq.shape
    outs = []
    for h in range(H):
        q = x @ wq[h]
        k = x @ wk[h]
        v = x @ wv[h]
        s = (q @ jnp.swapaxes(k, -1, -2)) * (C ** -0.5)
        mask = jnp.tril(jnp.ones((T, T), dtype=bool))
        s = jnp.where(mask, s, -jnp.inf)
        p = jax.nn.softmax(s, axis=-1)
        outs.append(p @ v)
    return jnp.concatenate(outs, axis=-1)


if __name__ == "__main__":
    B, T = 2, context_length
    key = jax.random.PRNGKey(0)
    kx, kq, kk, kv = jax.random.split(key, 4)

    x = jax.random.normal(kx, (B, T, inp_dim), dtype=jnp.float32)
    # deterministic parameter init (stand-in for nn.Linear weights)
    wq = jax.random.normal(kq, (n_heads, inp_dim, hid_dim), dtype=jnp.float32) * 0.05
    wk = jax.random.normal(kk, (n_heads, inp_dim, hid_dim), dtype=jnp.float32) * 0.05
    wv = jax.random.normal(kv, (n_heads, inp_dim, hid_dim), dtype=jnp.float32) * 0.05

    # Module-construction-time constants (hoisted off the per-call path).
    w_fused = fuse_head_weights(wq, wk, wv)
    bias = attention_bias(B, T)

    out = multi_head_attention(x, w_fused, bias)
    out = jax.block_until_ready(out)

    ref = _reference(x, wq, wk, wv)
    assert out.shape == (B, T, n_heads * hid_dim), out.shape
    # Tolerance covers bf16 MXU operands + EUP approximate reciprocal; all
    # accumulation and softmax math is f32.
    max_err = float(jnp.max(jnp.abs(out - ref)))
    assert jnp.allclose(out, ref, atol=2e-2, rtol=2e-2), max_err

    print("KERNEL_OK")
</pallas_src>

<mosaic_0001>
module attributes {stable_mosaic.version = 11 : i64} {
  func.func @_mha_kernel(%arg0: memref<16x64xf32, #tpu.memory_space<vmem>>, %arg1: memref<4x64x48xbf16, #tpu.memory_space<vmem>>, %arg2: memref<16x16xf32, #tpu.memory_space<vmem>>, %arg3: memref<16x64xf32, #tpu.memory_space<vmem>>) attributes {dimension_semantics = [], scalar_prefetch = 0 : i64, scratch_operands = 0 : i64, tpu.core_type = #tpu.core_type<tc>} {
    %c0 = arith.constant 0 : index
    %c0_0 = arith.constant 0 : index
    %0 = vector.load %arg0[%c0, %c0_0] : memref<16x64xf32, #tpu.memory_space<vmem>>, vector<16x64xf32>
    %1 = arith.truncf %0 : vector<16x64xf32> to vector<16x64xbf16>
    %2 = vector.shape_cast %1 : vector<16x64xbf16> to vector<1x16x64xbf16>
    %3 = vector.shape_cast %2 : vector<1x16x64xbf16> to vector<1x16x64xbf16>
    %4 = vector.broadcast %3 : vector<1x16x64xbf16> to vector<4x16x64xbf16>
    %c0_1 = arith.constant 0 : index
    %c0_2 = arith.constant 0 : index
    %c0_3 = arith.constant 0 : index
    %5 = vector.load %arg1[%c0_1, %c0_2, %c0_3] : memref<4x64x48xbf16, #tpu.memory_space<vmem>>, vector<4x64x48xbf16>
    "tpu.trace_start"() <{level = 10 : i32, message = "hme,hef->hmf"}> : () -> ()
    %cst = arith.constant dense<0.000000e+00> : vector<4x16x48xf32>
    %6 = tpu.matmul %4, %5, %cst {dimension_numbers = #tpu.dot_dimension_numbers<[2], [1], [1], [2], [0, 0, 0, 1, 1, 2], [0], [0]>} : vector<4x16x64xbf16>, vector<4x64x48xbf16>, vector<4x16x48xf32> -> vector<4x16x48xf32>
    "tpu.trace_stop"() : () -> ()
    %7 = vector.extract_strided_slice %6 {offsets = [0, 0, 0], sizes = [4, 16, 16], strides = [1, 1, 1]} : vector<4x16x48xf32> to vector<4x16x16xf32>
    %8 = arith.truncf %7 : vector<4x16x16xf32> to vector<4x16x16xbf16>
    %9 = vector.extract_strided_slice %6 {offsets = [0, 0, 16], sizes = [4, 16, 16], strides = [1, 1, 1]} : vector<4x16x48xf32> to vector<4x16x16xf32>
    %10 = arith.truncf %9 : vector<4x16x16xf32> to vector<4x16x16xbf16>
    %11 = vector.extract_strided_slice %6 {offsets = [0, 0, 32], sizes = [4, 16, 16], strides = [1, 1, 1]} : vector<4x16x48xf32> to vector<4x16x16xf32>
    %12 = arith.truncf %11 : vector<4x16x16xf32> to vector<4x16x16xbf16>
    "tpu.trace_start"() <{level = 10 : i32, message = "hmc,hnc->hmn"}> : () -> ()
    %cst_4 = arith.constant dense<0.000000e+00> : vector<4x16x16xf32>
    %13 = tpu.matmul %8, %10, %cst_4 {dimension_numbers = #tpu.dot_dimension_numbers<[2], [2], [1], [1], [0, 0, 0, 1, 1, 1], [0], [0]>} : vector<4x16x16xbf16>, vector<4x16x16xbf16>, vector<4x16x16xf32> -> vector<4x16x16xf32>
    "tpu.trace_stop"() : () -> ()
    %c0_5 = arith.constant 0 : index
    %c0_6 = arith.constant 0 : index
    %14 = vector.load %arg2[%c0_5, %c0_6] : memref<16x16xf32, #tpu.memory_space<vmem>>, vector<16x16xf32>
    %15 = vector.shape_cast %14 : vector<16x16xf32> to vector<1x16x16xf32>
    %16 = vector.broadcast %15 : vector<1x16x16xf32> to vector<4x16x16xf32>
    %17 = arith.addf %13, %16 : vector<4x16x16xf32>
    %cst_7 = arith.constant dense<0xFF800000> : vector<4x16xf32>
    %18 = vector.multi_reduction <maximumf>, %17, %cst_7 [2] : vector<4x16x16xf32> to vector<4x16xf32>
    %19 = vector.shape_cast %18 : vector<4x16xf32> to vector<4x16x1xf32>
    %20 = vector.broadcast %19 : vector<4x16x1xf32> to vector<4x16x16xf32>
    %21 = arith.subf %17, %20 : vector<4x16x16xf32>
    %22 = math.exp %21 : vector<4x16x16xf32>
    %cst_8 = arith.constant dense<0.000000e+00> : vector<4x16xf32>
    %23 = vector.multi_reduction <add>, %22, %cst_8 [2] : vector<4x16x16xf32> to vector<4x16xf32>
    %24 = vector.shape_cast %23 : vector<4x16xf32> to vector<4x16x1xf32>
    %25 = tpu.reciprocal %24 {approx = true} : vector<4x16x1xf32> -> vector<4x16x1xf32>
    %26 = vector.broadcast %25 : vector<4x16x1xf32> to vector<4x16x16xf32>
    %27 = arith.mulf %22, %26 : vector<4x16x16xf32>
    %28 = arith.truncf %27 : vector<4x16x16xf32> to vector<4x16x16xbf16>
    "tpu.trace_start"() <{level = 10 : i32, message = "hmn,hnc->hmc"}> : () -> ()
    %cst_9 = arith.constant dense<0.000000e+00> : vector<4x16x16xf32>
    %29 = tpu.matmul %28, %12, %cst_9 {dimension_numbers = #tpu.dot_dimension_numbers<[2], [1], [1], [2], [0, 0, 0, 1, 1, 2], [0], [0]>} : vector<4x16x16xbf16>, vector<4x16x16xbf16>, vector<4x16x16xf32> -> vector<4x16x16xf32>
    "tpu.trace_stop"() : () -> ()
    %30 = vector.extract_strided_slice %29 {offsets = [0, 0, 0], sizes = [1, 16, 16], strides = [1, 1, 1]} : vector<4x16x16xf32> to vector<1x16x16xf32>
    %31 = vector.shape_cast %30 : vector<1x16x16xf32> to vector<16x16xf32>
    %32 = vector.extract_strided_slice %29 {offsets = [1, 0, 0], sizes = [1, 16, 16], strides = [1, 1, 1]} : vector<4x16x16xf32> to vector<1x16x16xf32>
    %33 = vector.shape_cast %32 : vector<1x16x16xf32> to vector<16x16xf32>
    %34 = vector.extract_strided_slice %29 {offsets = [2, 0, 0], sizes = [1, 16, 16], strides = [1, 1, 1]} : vector<4x16x16xf32> to vector<1x16x16xf32>
    %35 = vector.shape_cast %34 : vector<1x16x16xf32> to vector<16x16xf32>
    %36 = vector.extract_strided_slice %29 {offsets = [3, 0, 0], sizes = [1, 16, 16], strides = [1, 1, 1]} : vector<4x16x16xf32> to vector<1x16x16xf32>
    %37 = vector.shape_cast %36 : vector<1x16x16xf32> to vector<16x16xf32>
    %38 = tpu.concatenate %31, %33, %35, %37 in 1 : vector<16x16xf32>, vector<16x16xf32>, vector<16x16xf32>, vector<16x16xf32> -> vector<16x64xf32>
    %c0_10 = arith.constant 0 : index
    %c0_11 = arith.constant 0 : index
    %39 = vector.load %arg3[%c0_10, %c0_11] : memref<16x64xf32, #tpu.memory_space<vmem>>, vector<16x64xf32>
    tpu.vector_store %arg3[%c0_10, %c0_11], %38 {strides = array<i32>} : memref<16x64xf32, #tpu.memory_space<vmem>>, vector<16x64xf32>,
    return
  }
}

</mosaic_0001>

<llo_original>
// kernel: tpu_custom_call.1
$region0: #{tpu_custom_call.1}
  #allocation0 [shape = 'u32[]', space=smem, size = 0x4, offset = 0x4, fixed_abs, tag = 'smem constant byte address 0x4 - core index']
  #allocation1 [shape = 'u32[144,128]{1,0:T(1,128)}', space=vmem, size = 0x12000, scoped, tag = 'internal scratch']
  %s0 = inlined_call_operand.vmem [shape: f32[16,64], index: 0, kind: input, shape index: {}]
  %s1 = inlined_call_operand.vmem [shape: bf16[4,64,48], index: 1, kind: input, shape index: {}]
  %s2 = inlined_call_operand.vmem [shape: f32[16,16], index: 2, kind: input, shape index: {}]
  %s3 = inlined_call_operand.hbm [shape: f32[16,64], index: 3, kind: output, shape index: {}]
  %s4 = sld [smem:[#allocation0]]
  $region22: #{tpu_custom_call.1} parent=0
    _
  %s6 = ssub.s32 1, %s4
  %s7 = scalar_select 0, %s6, %s4
  $region1: #{tpu_custom_call.1} parent=0
    #allocation2 [shape = 'u8[8192]{0}', space=vmem, size = 0x2000, scoped, tag = 'output window, operand 0, single buffered']
    #allocation3 [shape = 's32[1]{0}', space=sflag, size = 0x4, scoped, tag = 'scoped memory for tpu_custom_call.1']
    %8 = vsyncpa [#allocation3], 0
    // Predicated region
    $region2: #{tpu_custom_call.1} parent=1 // pred_check
      _
    $region3: #{tpu_custom_call.1} parent=1 // pred_check_branch
      %10 = sbr.rel (0) target = $region5
    $region4: #{tpu_custom_call.1} parent=1 // pred_region
      _
    $region5: #{tpu_custom_call.1} parent=1 // pred_fallthru
      _
    // Predicated region
    $region6: #{tpu_custom_call.1} parent=1 // pred_check
      _
    $region7: #{tpu_custom_call.1} parent=1 // pred_check_branch
      %12 = sbr.rel (0) target = $region9
    $region8: #{tpu_custom_call.1} parent=1 // pred_region
      _
    $region9: #{tpu_custom_call.1} parent=1 // pred_fallthru
      _
    // Predicated region
    $region10: #{tpu_custom_call.1} parent=1 // pred_check
      _
    $region11: #{tpu_custom_call.1} parent=1 // pred_check_branch
      %14 = sbr.rel (0) target = $region13
    $region12: #{tpu_custom_call.1} parent=1 // pred_region
      _
    $region13: #{tpu_custom_call.1} parent=1 // pred_fallthru
      _
    %v16 = vld [vmem:[%s0] sm:$0xff]
    %v17 = vld [vmem:[%s0 + $0x8] sm:$0xff]
    %v18 = vpack.c.bf16 %v17, %v16
    %v19 = vld [vmem:[%s1] sm:$0xf]
    %v20 = vld [vmem:[%s1 + $0x4] sm:$0xf]
    %v21 = vld [vmem:[%s1 + $0x8] sm:$0xf]
    %v22 = vld [vmem:[%s1 + $0xc] sm:$0xf]
    %v23 = vld [vmem:[%s1 + $0x10] sm:$0xf]
    %v24 = vld [vmem:[%s1 + $0x14] sm:$0xf]
    %v25 = vld [vmem:[%s1 + $0x18] sm:$0xf]
    %v26 = vld [vmem:[%s1 + $0x1c] sm:$0xf]
    %v27 = vld [vmem:[%s1 + $0x20] sm:$0xf]
    %v28 = vld [vmem:[%s1 + $0x24] sm:$0xf]
    %v29 = vld [vmem:[%s1 + $0x28] sm:$0xf]
    %v30 = vld [vmem:[%s1 + $0x2c] sm:$0xf]
    %v31 = vld [vmem:[%s1 + $0x30] sm:$0xf]
    %v32 = vld [vmem:[%s1 + $0x34] sm:$0xf]
    %v33 = vld [vmem:[%s1 + $0x38] sm:$0xf]
    %v34 = vld [vmem:[%s1 + $0x3c] sm:$0xf]
    %v35 = vld [vmem:[%s1 + $0x40] sm:$0xf]
    %v36 = vld [vmem:[%s1 + $0x44] sm:$0xf]
    %v37 = vld [vmem:[%s1 + $0x48] sm:$0xf]
    %v38 = vld [vmem:[%s1 + $0x4c] sm:$0xf]
    %v39 = vld [vmem:[%s1 + $0x50] sm:$0xf]
    %v40 = vld [vmem:[%s1 + $0x54] sm:$0xf]
    %v41 = vld [vmem:[%s1 + $0x58] sm:$0xf]
    %v42 = vld [vmem:[%s1 + $0x5c] sm:$0xf]
    %v43 = vld [vmem:[%s1 + $0x60] sm:$0xf]
    %v44 = vld [vmem:[%s1 + $0x64] sm:$0xf]
    %v45 = vld [vmem:[%s1 + $0x68] sm:$0xf]
    %v46 = vld [vmem:[%s1 + $0x6c] sm:$0xf]
    %v47 = vld [vmem:[%s1 + $0x70] sm:$0xf]
    %v48 = vld [vmem:[%s1 + $0x74] sm:$0xf]
    %v49 = vld [vmem:[%s1 + $0x78] sm:$0xf]
    %v50 = vld [vmem:[%s1 + $0x7c] sm:$0xf]
    %v59 = vunpack.c.l.b16 %v19
    %v60 = vunpack.c.l.b16 %v20
    %v61 = vunpack.c.l.b16 %v21
    %v62 = vunpack.c.l.b16 %v22
    %v63 = vunpack.c.l.b16 %v23
    %v64 = vunpack.c.l.b16 %v24
    %v65 = vunpack.c.l.b16 %v25
    %v66 = vunpack.c.l.b16 %v26
    %v67 = vpack.c.b16 %v60, %v59
    %v68 = vpack.c.b16 %v62, %v61
    %v69 = vpack.c.b16 %v64, %v63
    %v70 = vpack.c.b16 %v66, %v65
    %vm75 = vcmask 523264
    %v77 = vsel %vm75, %v18, 0
    %79 = vmatprep.subr.bf16.mxu0 0
    %80 = vmatpush1.bf16.msra.mxu0 %v67
    %81 = vmatprep.subr.bf16.mxu0 0
    %82 = vmatpush1.bf16.msra.mxu0 %v68
    %83 = vmatprep.subr.bf16.mxu0 0
    %84 = vmatpush1.bf16.msra.mxu0 %v69
    %85 = vmatprep.subr.bf16.mxu0 0
    %86 = vmatpush1.bf16.msra.mxu0 %v70
    %87 = vmatprep.subr.bf16.mxu0 0
    %88 = vmatpush1.bf16.msra.mxu0 0
    %89 = vmatprep.subr.bf16.mxu0 0
    %90 = vmatpush1.bf16.msra.mxu0 0
    %91 = vmatprep.subr.bf16.mxu0 0
    %92 = vmatpush1.bf16.msra.mxu0 0
    %93 = vmatprep.subr.bf16.mxu0 0
    %94 = vmatpush1.bf16.msra.mxu0 0
    %95 = vmatprep.subr.bf16.mxu0 0
    %96 = vmatpush1.bf16.msra.mxu0 0
    %97 = vmatprep.subr.bf16.mxu0 0
    %98 = vmatpush1.bf16.msra.mxu0 0
    %99 = vmatprep.subr.bf16.mxu0 0
    %100 = vmatpush1.bf16.msra.mxu0 0
    %101 = vmatprep.subr.bf16.mxu0 0
    %102 = vmatpush1.bf16.msra.mxu0 0
    %103 = vmatprep.subr.bf16.mxu0 0
    %104 = vmatpush1.bf16.msra.mxu0 0
    %105 = vmatprep.subr.bf16.mxu0 0
    %106 = vmatpush1.bf16.msra.mxu0 0
    %107 = vmatprep.subr.bf16.mxu0 0
    %108 = vmatpush1.bf16.msra.mxu0 0
    %109 = vmatprep.subr.bf16.mxu0 0
    %110 = vmatpush1.bf16.msra.mxu0 0
    %111 = vmatprep.mubr.bf16.mxu0 0
    %112 = vmatmul.mubr.bf16.gmra.mrb[0].mxu0 %v77
    %v113 = vpop.f32.mrb[0].mxu0
    %v114 = vadd.f32 0.0, %v113
    %v115 = vpop.f32.mrb[0].mxu0
    %v116 = vpop.f32.mrb[0].mxu0
    %v117 = vadd.f32 0.0, %v116
    %v118 = vpop.f32.mrb[0].mxu0
    %119 = vdwg.mxu0
    %v128 = vunpack.c.l.b16 %v27
    %v129 = vunpack.c.l.b16 %v28
    %v130 = vunpack.c.l.b16 %v29
    %v131 = vunpack.c.l.b16 %v30
    %v132 = vunpack.c.l.b16 %v31
    %v133 = vunpack.c.l.b16 %v32
    %v134 = vunpack.c.l.b16 %v33
    %v135 = vunpack.c.l.b16 %v34
    %v136 = vpack.c.b16 %v129, %v128
    %v137 = vpack.c.b16 %v131, %v130
    %v138 = vpack.c.b16 %v133, %v132
    %v139 = vpack.c.b16 %v135, %v134
    %144 = vmatprep.subr.bf16.mxu0 0
    %145 = vmatpush1.bf16.msra.mxu0 %v136
    %146 = vmatprep.subr.bf16.mxu0 0
    %147 = vmatpush1.bf16.msra.mxu0 %v137
    %148 = vmatprep.subr.bf16.mxu0 0
    %149 = vmatpush1.bf16.msra.mxu0 %v138
    %150 = vmatprep.subr.bf16.mxu0 0
    %151 = vmatpush1.bf16.msra.mxu0 %v139
    %152 = vmatprep.subr.bf16.mxu0 0
    %153 = vmatpush1.bf16.msra.mxu0 0
    %154 = vmatprep.subr.bf16.mxu0 0
    %155 = vmatpush1.bf16.msra.mxu0 0
    %156 = vmatprep.subr.bf16.mxu0 0
    %157 = vmatpush1.bf16.msra.mxu0 0
    %158 = vmatprep.subr.bf16.mxu0 0
    %159 = vmatpush1.bf16.msra.mxu0 0
    %160 = vmatprep.subr.bf16.mxu0 0
    %161 = vmatpush1.bf16.msra.mxu0 0
    %162 = vmatprep.subr.bf16.mxu0 0
    %163 = vmatpush1.bf16.msra.mxu0 0
    %164 = vmatprep.subr.bf16.mxu0 0
    %165 = vmatpush1.bf16.msra.mxu0 0
    %166 = vmatprep.subr.bf16.mxu0 0
    %167 = vmatpush1.bf16.msra.mxu0 0
    %168 = vmatprep.subr.bf16.mxu0 0
    %169 = vmatpush1.bf16.msra.mxu0 0
    %170 = vmatprep.subr.bf16.mxu0 0
    %171 = vmatpush1.bf16.msra.mxu0 0
    %172 = vmatprep.subr.bf16.mxu0 0
    %173 = vmatpush1.bf16.msra.mxu0 0
    %174 = vmatprep.subr.bf16.mxu0 0
    %175 = vmatpush1.bf16.msra.mxu0 0
    %176 = vmatprep.mubr.bf16.mxu0 0
    %177 = vmatmul.mubr.bf16.gmra.mrb[0].mxu0 %v77
    %v178 = vpop.f32.mrb[0].mxu0
    %v179 = vadd.f32 0.0, %v178
    %v180 = vpop.f32.mrb[0].mxu0
    %v181 = vpop.f32.mrb[0].mxu0
    %v182 = vadd.f32 0.0, %v181
    %v183 = vpop.f32.mrb[0].mxu0
    %184 = vdwg.mxu0
    %v193 = vunpack.c.l.b16 %v35
    %v194 = vunpack.c.l.b16 %v36
    %v195 = vunpack.c.l.b16 %v37
    %v196 = vunpack.c.l.b16 %v38
    %v197 = vunpack.c.l.b16 %v39
    %v198 = vunpack.c.l.b16 %v40
    %v199 = vunpack.c.l.b16 %v41
    %v200 = vunpack.c.l.b16 %v42
    %v201 = vpack.c.b16 %v194, %v193
    %v202 = vpack.c.b16 %v196, %v195
    %v203 = vpack.c.b16 %v198, %v197
    %v204 = vpack.c.b16 %v200, %v199
    %209 = vmatprep.subr.bf16.mxu0 0
    %210 = vmatpush1.bf16.msra.mxu0 %v201
    %211 = vmatprep.subr.bf16.mxu0 0
    %212 = vmatpush1.bf16.msra.mxu0 %v202
    %213 = vmatprep.subr.bf16.mxu0 0
    %214 = vmatpush1.bf16.msra.mxu0 %v203
    %215 = vmatprep.subr.bf16.mxu0 0
    %216 = vmatpush1.bf16.msra.mxu0 %v204
    %217 = vmatprep.subr.bf16.mxu0 0
    %218 = vmatpush1.bf16.msra.mxu0 0
    %219 = vmatprep.subr.bf16.mxu0 0
    %220 = vmatpush1.bf16.msra.mxu0 0
    %221 = vmatprep.subr.bf16.mxu0 0
    %222 = vmatpush1.bf16.msra.mxu0 0
    %223 = vmatprep.subr.bf16.mxu0 0
    %224 = vmatpush1.bf16.msra.mxu0 0
    %225 = vmatprep.subr.bf16.mxu0 0
    %226 = vmatpush1.bf16.msra.mxu0 0
    %227 = vmatprep.subr.bf16.mxu0 0
    %228 = vmatpush1.bf16.msra.mxu0 0
    %229 = vmatprep.subr.bf16.mxu0 0
    %230 = vmatpush1.bf16.msra.mxu0 0
    %231 = vmatprep.subr.bf16.mxu0 0
    %232 = vmatpush1.bf16.msra.mxu0 0
    %233 = vmatprep.subr.bf16.mxu0 0
    %234 = vmatpush1.bf16.msra.mxu0 0
    %235 = vmatprep.subr.bf16.mxu0 0
    %236 = vmatpush1.bf16.msra.mxu0 0
    %237 = vmatprep.subr.bf16.mxu0 0
    %238 = vmatpush1.bf16.msra.mxu0 0
    %239 = vmatprep.subr.bf16.mxu0 0
    %240 = vmatpush1.bf16.msra.mxu0 0
    %241 = vmatprep.mubr.bf16.mxu0 0
    %242 = vmatmul.mubr.bf16.gmra.mrb[0].mxu0 %v77
    %v243 = vpop.f32.mrb[0].mxu0
    %v244 = vadd.f32 0.0, %v243
    %v245 = vpop.f32.mrb[0].mxu0
    %v246 = vpop.f32.mrb[0].mxu0
    %v247 = vadd.f32 0.0, %v246
    %v248 = vpop.f32.mrb[0].mxu0
    %249 = vdwg.mxu0
    %v258 = vunpack.c.l.b16 %v43
    %v259 = vunpack.c.l.b16 %v44
    %v260 = vunpack.c.l.b16 %v45
    %v261 = vunpack.c.l.b16 %v46
    %v262 = vunpack.c.l.b16 %v47
    %v263 = vunpack.c.l.b16 %v48
    %v264 = vunpack.c.l.b16 %v49
    %v265 = vunpack.c.l.b16 %v50
    %v266 = vpack.c.b16 %v259, %v258
    %v267 = vpack.c.b16 %v261, %v260
    %v268 = vpack.c.b16 %v263, %v262
    %v269 = vpack.c.b16 %v265, %v264
    %274 = vmatprep.subr.bf16.mxu0 0
    %275 = vmatpush1.bf16.msra.mxu0 %v266
    %276 = vmatprep.subr.bf16.mxu0 0
    %277 = vmatpush1.bf16.msra.mxu0 %v267
    %278 = vmatprep.subr.bf16.mxu0 0
    %279 = vmatpush1.bf16.msra.mxu0 %v268
    %280 = vmatprep.subr.bf16.mxu0 0
    %281 = vmatpush1.bf16.msra.mxu0 %v269
    %282 = vmatprep.subr.bf16.mxu0 0
    %283 = vmatpush1.bf16.msra.mxu0 0
    %284 = vmatprep.subr.bf16.mxu0 0
    %285 = vmatpush1.bf16.msra.mxu0 0
    %286 = vmatprep.subr.bf16.mxu0 0
    %287 = vmatpush1.bf16.msra.mxu0 0
    %288 = vmatprep.subr.bf16.mxu0 0
    %289 = vmatpush1.bf16.msra.mxu0 0
    %290 = vmatprep.subr.bf16.mxu0 0
    %291 = vmatpush1.bf16.msra.mxu0 0
    %292 = vmatprep.subr.bf16.mxu0 0
    %293 = vmatpush1.bf16.msra.mxu0 0
    %294 = vmatprep.subr.bf16.mxu0 0
    %295 = vmatpush1.bf16.msra.mxu0 0
    %296 = vmatprep.subr.bf16.mxu0 0
    %297 = vmatpush1.bf16.msra.mxu0 0
    %298 = vmatprep.subr.bf16.mxu0 0
    %299 = vmatpush1.bf16.msra.mxu0 0
    %300 = vmatprep.subr.bf16.mxu0 0
    %301 = vmatpush1.bf16.msra.mxu0 0
    %302 = vmatprep.subr.bf16.mxu0 0
    %303 = vmatpush1.bf16.msra.mxu0 0
    %304 = vmatprep.subr.bf16.mxu0 0
    %305 = vmatpush1.bf16.msra.mxu0 0
    %306 = vmatprep.mubr.bf16.mxu0 0
    %307 = vmatmul.mubr.bf16.gmra.mrb[0].mxu0 %v77
    %v308 = vpop.f32.mrb[0].mxu0
    %v309 = vadd.f32 0.0, %v308
    %v310 = vpop.f32.mrb[0].mxu0
    %v311 = vpop.f32.mrb[0].mxu0
    %v312 = vadd.f32 0.0, %v311
    %v313 = vpop.f32.mrb[0].mxu0
    %314 = vdwg.mxu0
    %v315 = vpack.c.bf16 %v117, %v114
    %v316 = vpack.c.bf16 %v182, %v179
    %v317 = vpack.c.bf16 %v247, %v244
    %v318 = vpack.c.bf16 %v312, %v309
    %v319 = vld [vmem:[%s2] sm:$0xff]
    %v320 = vld [vmem:[%s2 + $0x8] sm:$0xff]
    %322 = vrot.lane.b32.xlu0 %v315, 112
    %v323 = vpop.permute.xlu0 %322
    %vm324 = vcmask 130048
    %v326 = vsel %vm324, %v315, 0
    %v329 = vsel %vm324, %v323, 0
    %331 = vmatprep.subr.bf16.mxu0 0
    %332 = vmatpush1.bf16.xpose.msra.mxu0 %v329
    %333 = vmatprep.subr.bf16.mxu0 0
    %334 = vmatpush1.bf16.xpose.msra.mxu0 0
    %335 = vmatprep.subr.bf16.mxu0 0
    %336 = vmatpush1.bf16.xpose.msra.mxu0 0
    %337 = vmatprep.subr.bf16.mxu0 0
    %338 = vmatpush1.bf16.xpose.msra.mxu0 0
    %339 = vmatprep.subr.bf16.mxu0 0
    %340 = vmatpush1.bf16.xpose.msra.mxu0 0
    %341 = vmatprep.subr.bf16.mxu0 0
    %342 = vmatpush1.bf16.xpose.msra.mxu0 0
    %343 = vmatprep.subr.bf16.mxu0 0
    %344 = vmatpush1.bf16.xpose.msra.mxu0 0
    %345 = vmatprep.subr.bf16.mxu0 0
    %346 = vmatpush1.bf16.xpose.msra.mxu0 0
    %347 = vmatprep.subr.bf16.mxu0 0
    %348 = vmatpush1.bf16.xpose.msra.mxu0 0
    %349 = vmatprep.subr.bf16.mxu0 0
    %350 = vmatpush1.bf16.xpose.msra.mxu0 0
    %351 = vmatprep.subr.bf16.mxu0 0
    %352 = vmatpush1.bf16.xpose.msra.mxu0 0
    %353 = vmatprep.subr.bf16.mxu0 0
    %354 = vmatpush1.bf16.xpose.msra.mxu0 0
    %355 = vmatprep.subr.bf16.mxu0 0
    %356 = vmatpush1.bf16.xpose.msra.mxu0 0
    %357 = vmatprep.subr.bf16.mxu0 0
    %358 = vmatpush1.bf16.xpose.msra.mxu0 0
    %359 = vmatprep.subr.bf16.mxu0 0
    %360 = vmatpush1.bf16.xpose.msra.mxu0 0
    %361 = vmatprep.subr.bf16.mxu0 0
    %362 = vmatpush1.bf16.xpose.msra.mxu0 0
    %363 = vmatprep.mubr.bf16.mxu0 0
    %364 = vmatmul.mubr.bf16.gmra.mrb[0].mxu0 %v326
    %v365 = vpop.f32.mrb[0].mxu0
    %v366 = vadd.f32 %v319, %v365
    %v367 = vpop.f32.mrb[0].mxu0
    %v368 = vpop.f32.mrb[0].mxu0
    %v369 = vadd.f32 %v320, %v368
    %v370 = vpop.f32.mrb[0].mxu0
    %371 = vdwg.mxu0
    %373 = vrot.lane.b32.xlu0 %v316, 112
    %v374 = vpop.permute.xlu0 %373
    %v376 = vsel %vm324, %v316, 0
    %v379 = vsel %vm324, %v374, 0
    %381 = vmatprep.subr.bf16.mxu0 0
    %382 = vmatpush1.bf16.xpose.msra.mxu0 %v379
    %383 = vmatprep.subr.bf16.mxu0 0
    %384 = vmatpush1.bf16.xpose.msra.mxu0 0
    %385 = vmatprep.subr.bf16.mxu0 0
    %386 = vmatpush1.bf16.xpose.msra.mxu0 0
    %387 = vmatprep.subr.bf16.mxu0 0
    %388 = vmatpush1.bf16.xpose.msra.mxu0 0
    %389 = vmatprep.subr.bf16.mxu0 0
    %390 = vmatpush1.bf16.xpose.msra.mxu0 0
    %391 = vmatprep.subr.bf16.mxu0 0
    %392 = vmatpush1.bf16.xpose.msra.mxu0 0
    %393 = vmatprep.subr.bf16.mxu0 0
    %394 = vmatpush1.bf16.xpose.msra.mxu0 0
    %395 = vmatprep.subr.bf16.mxu0 0
    %396 = vmatpush1.bf16.xpose.msra.mxu0 0
    %397 = vmatprep.subr.bf16.mxu0 0
    %398 = vmatpush1.bf16.xpose.msra.mxu0 0
    %399 = vmatprep.subr.bf16.mxu0 0
    %400 = vmatpush1.bf16.xpose.msra.mxu0 0
    %401 = vmatprep.subr.bf16.mxu0 0
    %402 = vmatpush1.bf16.xpose.msra.mxu0 0
    %403 = vmatprep.subr.bf16.mxu0 0
    %404 = vmatpush1.bf16.xpose.msra.mxu0 0
    %405 = vmatprep.subr.bf16.mxu0 0
    %406 = vmatpush1.bf16.xpose.msra.mxu0 0
    %407 = vmatprep.subr.bf16.mxu0 0
    %408 = vmatpush1.bf16.xpose.msra.mxu0 0
    %409 = vmatprep.subr.bf16.mxu0 0
    %410 = vmatpush1.bf16.xpose.msra.mxu0 0
    %411 = vmatprep.subr.bf16.mxu0 0
    %412 = vmatpush1.bf16.xpose.msra.mxu0 0
    %413 = vmatprep.mubr.bf16.mxu0 0
    %414 = vmatmul.mubr.bf16.gmra.mrb[0].mxu0 %v376
    %v415 = vpop.f32.mrb[0].mxu0
    %v416 = vadd.f32 %v319, %v415
    %v417 = vpop.f32.mrb[0].mxu0
    %v418 = vpop.f32.mrb[0].mxu0
    %v419 = vadd.f32 %v320, %v418
    %v420 = vpop.f32.mrb[0].mxu0
    %421 = vdwg.mxu0
    %423 = vrot.lane.b32.xlu0 %v317, 112
    %v424 = vpop.permute.xlu0 %423
    %v426 = vsel %vm324, %v317, 0
    %v429 = vsel %vm324, %v424, 0
    %431 = vmatprep.subr.bf16.mxu0 0
    %432 = vmatpush1.bf16.xpose.msra.mxu0 %v429
    %433 = vmatprep.subr.bf16.mxu0 0
    %434 = vmatpush1.bf16.xpose.msra.mxu0 0
    %435 = vmatprep.subr.bf16.mxu0 0
    %436 = vmatpush1.bf16.xpose.msra.mxu0 0
    %437 = vmatprep.subr.bf16.mxu0 0
    %438 = vmatpush1.bf16.xpose.msra.mxu0 0
    %439 = vmatprep.subr.bf16.mxu0 0
    %440 = vmatpush1.bf16.xpose.msra.mxu0 0
    %441 = vmatprep.subr.bf16.mxu0 0
    %442 = vmatpush1.bf16.xpose.msra.mxu0 0
    %443 = vmatprep.subr.bf16.mxu0 0
    %444 = vmatpush1.bf16.xpose.msra.mxu0 0
    %445 = vmatprep.subr.bf16.mxu0 0
    %446 = vmatpush1.bf16.xpose.msra.mxu0 0
    %447 = vmatprep.subr.bf16.mxu0 0
    %448 = vmatpush1.bf16.xpose.msra.mxu0 0
    %449 = vmatprep.subr.bf16.mxu0 0
    %450 = vmatpush1.bf16.xpose.msra.mxu0 0
    %451 = vmatprep.subr.bf16.mxu0 0
    %452 = vmatpush1.bf16.xpose.msra.mxu0 0
    %453 = vmatprep.subr.bf16.mxu0 0
    %454 = vmatpush1.bf16.xpose.msra.mxu0 0
    %455 = vmatprep.subr.bf16.mxu0 0
    %456 = vmatpush1.bf16.xpose.msra.mxu0 0
    %457 = vmatprep.subr.bf16.mxu0 0
    %458 = vmatpush1.bf16.xpose.msra.mxu0 0
    %459 = vmatprep.subr.bf16.mxu0 0
    %460 = vmatpush1.bf16.xpose.msra.mxu0 0
    %461 = vmatprep.subr.bf16.mxu0 0
    %462 = vmatpush1.bf16.xpose.msra.mxu0 0
    %463 = vmatprep.mubr.bf16.mxu0 0
    %464 = vmatmul.mubr.bf16.gmra.mrb[0].mxu0 %v426
    %v465 = vpop.f32.mrb[0].mxu0
    %v466 = vadd.f32 %v319, %v465
    %v467 = vpop.f32.mrb[0].mxu0
    %v468 = vpop.f32.mrb[0].mxu0
    %v469 = vadd.f32 %v320, %v468
    %v470 = vpop.f32.mrb[0].mxu0
    %471 = vdwg.mxu0
    %473 = vrot.lane.b32.xlu0 %v318, 112
    %v474 = vpop.permute.xlu0 %473
    %v476 = vsel %vm324, %v318, 0
    %v479 = vsel %vm324, %v474, 0
    %481 = vmatprep.subr.bf16.mxu0 0
    %482 = vmatpush1.bf16.xpose.msra.mxu0 %v479
    %483 = vmatprep.subr.bf16.mxu0 0
    %484 = vmatpush1.bf16.xpose.msra.mxu0 0
    %485 = vmatprep.subr.bf16.mxu0 0
    %486 = vmatpush1.bf16.xpose.msra.mxu0 0
    %487 = vmatprep.subr.bf16.mxu0 0
    %488 = vmatpush1.bf16.xpose.msra.mxu0 0
    %489 = vmatprep.subr.bf16.mxu0 0
    %490 = vmatpush1.bf16.xpose.msra.mxu0 0
    %491 = vmatprep.subr.bf16.mxu0 0
    %492 = vmatpush1.bf16.xpose.msra.mxu0 0
    %493 = vmatprep.subr.bf16.mxu0 0
    %494 = vmatpush1.bf16.xpose.msra.mxu0 0
    %495 = vmatprep.subr.bf16.mxu0 0
    %496 = vmatpush1.bf16.xpose.msra.mxu0 0
    %497 = vmatprep.subr.bf16.mxu0 0
    %498 = vmatpush1.bf16.xpose.msra.mxu0 0
    %499 = vmatprep.subr.bf16.mxu0 0
    %500 = vmatpush1.bf16.xpose.msra.mxu0 0
    %501 = vmatprep.subr.bf16.mxu0 0
    %502 = vmatpush1.bf16.xpose.msra.mxu0 0
    %503 = vmatprep.subr.bf16.mxu0 0
    %504 = vmatpush1.bf16.xpose.msra.mxu0 0
    %505 = vmatprep.subr.bf16.mxu0 0
    %506 = vmatpush1.bf16.xpose.msra.mxu0 0
    %507 = vmatprep.subr.bf16.mxu0 0
    %508 = vmatpush1.bf16.xpose.msra.mxu0 0
    %509 = vmatprep.subr.bf16.mxu0 0
    %510 = vmatpush1.bf16.xpose.msra.mxu0 0
    %511 = vmatprep.subr.bf16.mxu0 0
    %512 = vmatpush1.bf16.xpose.msra.mxu0 0
    %513 = vmatprep.mubr.bf16.mxu0 0
    %514 = vmatmul.mubr.bf16.gmra.mrb[0].mxu0 %v476
    %v515 = vpop.f32.mrb[0].mxu0
    %v516 = vadd.f32 %v319, %v515
    %v517 = vpop.f32.mrb[0].mxu0
    %v518 = vpop.f32.mrb[0].mxu0
    %v519 = vadd.f32 %v320, %v518
    %v520 = vpop.f32.mrb[0].mxu0
    %521 = vdwg.mxu0
    %v522 = vsel %vm324, %v366, -inf
    %523 = vmax.xlane.f32.xlu0 %v522
    %v524 = vpop.xlane.xlu0 %523
    %v525 = vsel %vm324, %v369, -inf
    %526 = vmax.xlane.f32.xlu0 %v525
    %v527 = vpop.xlane.xlu0 %526
    %v528 = vsel %vm324, %v416, -inf
    %529 = vmax.xlane.f32.xlu0 %v528
    %v530 = vpop.xlane.xlu0 %529
    %v531 = vsel %vm324, %v419, -inf
    %532 = vmax.xlane.f32.xlu0 %v531
    %v533 = vpop.xlane.xlu0 %532
    %v534 = vsel %vm324, %v466, -inf
    %535 = vmax.xlane.f32.xlu0 %v534
    %v536 = vpop.xlane.xlu0 %535
    %v537 = vsel %vm324, %v469, -inf
    %538 = vmax.xlane.f32.xlu0 %v537
    %v539 = vpop.xlane.xlu0 %538
    %v540 = vsel %vm324, %v516, -inf
    %541 = vmax.xlane.f32.xlu0 %v540
    %v542 = vpop.xlane.xlu0 %541
    %v543 = vsel %vm324, %v519, -inf
    %544 = vmax.xlane.f32.xlu0 %v543
    %v545 = vpop.xlane.xlu0 %544
    %v546 = vsub.f32 %v366, %v524
    %v547 = vsub.f32 %v369, %v527
    %v548 = vsub.f32 %v416, %v530
    %v549 = vsub.f32 %v419, %v533
    %v550 = vsub.f32 %v466, %v536
    %v551 = vsub.f32 %v469, %v539
    %v552 = vsub.f32 %v516, %v542
    %v553 = vsub.f32 %v519, %v545
    %v554 = vmul.f32 %v546, 1.442695
    %v555 = vpow.pop %v554
    %v556 = vmul.f32 %v547, 1.442695
    %v557 = vpow.pop %v556
    %v558 = vmul.f32 %v548, 1.442695
    %v559 = vpow.pop %v558
    %v560 = vmul.f32 %v549, 1.442695
    %v561 = vpow.pop %v560
    %v562 = vmul.f32 %v550, 1.442695
    %v563 = vpow.pop %v562
    %v564 = vmul.f32 %v551, 1.442695
    %v565 = vpow.pop %v564
    %v566 = vmul.f32 %v552, 1.442695
    %v567 = vpow.pop %v566
    %v568 = vmul.f32 %v553, 1.442695
    %v569 = vpow.pop %v568
    %v570 = vsel %vm324, %v555, 0.0
    %571 = vadd.xlane.f32.xlu0 %v570
    %v572 = vpop.xlane.xlu0 %571
    %v573 = vsel %vm324, %v557, 0.0
    %574 = vadd.xlane.f32.xlu0 %v573
    %v575 = vpop.xlane.xlu0 %574
    %v576 = vsel %vm324, %v559, 0.0
    %577 = vadd.xlane.f32.xlu0 %v576
    %v578 = vpop.xlane.xlu0 %577
    %v579 = vsel %vm324, %v561, 0.0
    %580 = vadd.xlane.f32.xlu0 %v579
    %v581 = vpop.xlane.xlu0 %580
    %v582 = vsel %vm324, %v563, 0.0
    %583 = vadd.xlane.f32.xlu0 %v582
    %v584 = vpop.xlane.xlu0 %583
    %v585 = vsel %vm324, %v565, 0.0
    %586 = vadd.xlane.f32.xlu0 %v585
    %v587 = vpop.xlane.xlu0 %586
    %v588 = vsel %vm324, %v567, 0.0
    %589 = vadd.xlane.f32.xlu0 %v588
    %v590 = vpop.xlane.xlu0 %589
    %v591 = vsel %vm324, %v569, 0.0
    %592 = vadd.xlane.f32.xlu0 %v591
    %v593 = vpop.xlane.xlu0 %592
    %v594 = vrcp.pop %v572
    %v595 = vrcp.pop %v575
    %v596 = vrcp.pop %v578
    %v597 = vrcp.pop %v581
    %v598 = vrcp.pop %v584
    %v599 = vrcp.pop %v587
    %v600 = vrcp.pop %v590
    %v601 = vrcp.pop %v593
    %v602 = vmul.f32 %v555, %v594
    %v603 = vmul.f32 %v557, %v595
    %v604 = vmul.f32 %v559, %v596
    %v605 = vmul.f32 %v561, %v597
    %v606 = vmul.f32 %v563, %v598
    %v607 = vmul.f32 %v565, %v599
    %v608 = vmul.f32 %v567, %v600
    %v609 = vmul.f32 %v569, %v601
    %v610 = vpack.c.bf16 %v603, %v602
    %v611 = vpack.c.bf16 %v605, %v604
    %v612 = vpack.c.bf16 %v607, %v606
    %v613 = vpack.c.bf16 %v609, %v608
    %614 = vrot.lane.b32.xlu0 %v315, 96
    %v615 = vpop.permute.xlu0 %614
    %v618 = vsel %vm324, %v610, 0
    %620 = vmatprep.subr.bf16.mxu0 0
    %621 = vmatpush1.bf16.msra.mxu0 %v615
    %622 = vmatprep.subr.bf16.mxu0 0
    %623 = vmatpush1.bf16.msra.mxu0 0
    %624 = vmatprep.subr.bf16.mxu0 0
    %625 = vmatpush1.bf16.msra.mxu0 0
    %626 = vmatprep.subr.bf16.mxu0 0
    %627 = vmatpush1.bf16.msra.mxu0 0
    %628 = vmatprep.subr.bf16.mxu0 0
    %629 = vmatpush1.bf16.msra.mxu0 0
    %630 = vmatprep.subr.bf16.mxu0 0
    %631 = vmatpush1.bf16.msra.mxu0 0
    %632 = vmatprep.subr.bf16.mxu0 0
    %633 = vmatpush1.bf16.msra.mxu0 0
    %634 = vmatprep.subr.bf16.mxu0 0
    %635 = vmatpush1.bf16.msra.mxu0 0
    %636 = vmatprep.subr.bf16.mxu0 0
    %637 = vmatpush1.bf16.msra.mxu0 0
    %638 = vmatprep.subr.bf16.mxu0 0
    %639 = vmatpush1.bf16.msra.mxu0 0
    %640 = vmatprep.subr.bf16.mxu0 0
    %641 = vmatpush1.bf16.msra.mxu0 0
    %642 = vmatprep.subr.bf16.mxu0 0
    %643 = vmatpush1.bf16.msra.mxu0 0
    %644 = vmatprep.subr.bf16.mxu0 0
    %645 = vmatpush1.bf16.msra.mxu0 0
    %646 = vmatprep.subr.bf16.mxu0 0
    %647 = vmatpush1.bf16.msra.mxu0 0
    %648 = vmatprep.subr.bf16.mxu0 0
    %649 = vmatpush1.bf16.msra.mxu0 0
    %650 = vmatprep.subr.bf16.mxu0 0
    %651 = vmatpush1.bf16.msra.mxu0 0
    %652 = vmatprep.mubr.bf16.mxu0 0
    %653 = vmatmul.mubr.bf16.gmra.mrb[0].mxu0 %v618
    %v654 = vpop.f32.mrb[0].mxu0
    %v655 = vadd.f32 0.0, %v654
    %v656 = vpop.f32.mrb[0].mxu0
    %v657 = vpop.f32.mrb[0].mxu0
    %v658 = vadd.f32 0.0, %v657
    %v659 = vpop.f32.mrb[0].mxu0
    %660 = vdwg.mxu0
    %661 = vrot.lane.b32.xlu0 %v316, 96
    %v662 = vpop.permute.xlu0 %661
    %v665 = vsel %vm324, %v611, 0
    %667 = vmatprep.subr.bf16.mxu0 0
    %668 = vmatpush1.bf16.msra.mxu0 %v662
    %669 = vmatprep.subr.bf16.mxu0 0
    %670 = vmatpush1.bf16.msra.mxu0 0
    %671 = vmatprep.subr.bf16.mxu0 0
    %672 = vmatpush1.bf16.msra.mxu0 0
    %673 = vmatprep.subr.bf16.mxu0 0
    %674 = vmatpush1.bf16.msra.mxu0 0
    %675 = vmatprep.subr.bf16.mxu0 0
    %676 = vmatpush1.bf16.msra.mxu0 0
    %677 = vmatprep.subr.bf16.mxu0 0
    %678 = vmatpush1.bf16.msra.mxu0 0
    %679 = vmatprep.subr.bf16.mxu0 0
    %680 = vmatpush1.bf16.msra.mxu0 0
    %681 = vmatprep.subr.bf16.mxu0 0
    %682 = vmatpush1.bf16.msra.mxu0 0
    %683 = vmatprep.subr.bf16.mxu0 0
    %684 = vmatpush1.bf16.msra.mxu0 0
    %685 = vmatprep.subr.bf16.mxu0 0
    %686 = vmatpush1.bf16.msra.mxu0 0
    %687 = vmatprep.subr.bf16.mxu0 0
    %688 = vmatpush1.bf16.msra.mxu0 0
    %689 = vmatprep.subr.bf16.mxu0 0
    %690 = vmatpush1.bf16.msra.mxu0 0
    %691 = vmatprep.subr.bf16.mxu0 0
    %692 = vmatpush1.bf16.msra.mxu0 0
    %693 = vmatprep.subr.bf16.mxu0 0
    %694 = vmatpush1.bf16.msra.mxu0 0
    %695 = vmatprep.subr.bf16.mxu0 0
    %696 = vmatpush1.bf16.msra.mxu0 0
    %697 = vmatprep.subr.bf16.mxu0 0
    %698 = vmatpush1.bf16.msra.mxu0 0
    %699 = vmatprep.mubr.bf16.mxu0 0
    %700 = vmatmul.mubr.bf16.gmra.mrb[0].mxu0 %v665
    %v701 = vpop.f32.mrb[0].mxu0
    %v702 = vadd.f32 0.0, %v701
    %v703 = vpop.f32.mrb[0].mxu0
    %v704 = vpop.f32.mrb[0].mxu0
    %v705 = vadd.f32 0.0, %v704
    %v706 = vpop.f32.mrb[0].mxu0
    %707 = vdwg.mxu0
    %708 = vrot.lane.b32.xlu0 %v317, 96
    %v709 = vpop.permute.xlu0 %708
    %v712 = vsel %vm324, %v612, 0
    %714 = vmatprep.subr.bf16.mxu0 0
    %715 = vmatpush1.bf16.msra.mxu0 %v709
    %716 = vmatprep.subr.bf16.mxu0 0
    %717 = vmatpush1.bf16.msra.mxu0 0
    %718 = vmatprep.subr.bf16.mxu0 0
    %719 = vmatpush1.bf16.msra.mxu0 0
    %720 = vmatprep.subr.bf16.mxu0 0
    %721 = vmatpush1.bf16.msra.mxu0 0
    %722 = vmatprep.subr.bf16.mxu0 0
    %723 = vmatpush1.bf16.msra.mxu0 0
    %724 = vmatprep.subr.bf16.mxu0 0
    %725 = vmatpush1.bf16.msra.mxu0 0
    %726 = vmatprep.subr.bf16.mxu0 0
    %727 = vmatpush1.bf16.msra.mxu0 0
    %728 = vmatprep.subr.bf16.mxu0 0
    %729 = vmatpush1.bf16.msra.mxu0 0
    %730 = vmatprep.subr.bf16.mxu0 0
    %731 = vmatpush1.bf16.msra.mxu0 0
    %732 = vmatprep.subr.bf16.mxu0 0
    %733 = vmatpush1.bf16.msra.mxu0 0
    %734 = vmatprep.subr.bf16.mxu0 0
    %735 = vmatpush1.bf16.msra.mxu0 0
    %736 = vmatprep.subr.bf16.mxu0 0
    %737 = vmatpush1.bf16.msra.mxu0 0
    %738 = vmatprep.subr.bf16.mxu0 0
    %739 = vmatpush1.bf16.msra.mxu0 0
    %740 = vmatprep.subr.bf16.mxu0 0
    %741 = vmatpush1.bf16.msra.mxu0 0
    %742 = vmatprep.subr.bf16.mxu0 0
    %743 = vmatpush1.bf16.msra.mxu0 0
    %744 = vmatprep.subr.bf16.mxu0 0
    %745 = vmatpush1.bf16.msra.mxu0 0
    %746 = vmatprep.mubr.bf16.mxu0 0
    %747 = vmatmul.mubr.bf16.gmra.mrb[0].mxu0 %v712
    %v748 = vpop.f32.mrb[0].mxu0
    %v749 = vadd.f32 0.0, %v748
    %v750 = vpop.f32.mrb[0].mxu0
    %v751 = vpop.f32.mrb[0].mxu0
    %v752 = vadd.f32 0.0, %v751
    %v753 = vpop.f32.mrb[0].mxu0
    %754 = vdwg.mxu0
    %755 = vrot.lane.b32.xlu0 %v318, 96
    %v756 = vpop.permute.xlu0 %755
    %v759 = vsel %vm324, %v613, 0
    %761 = vmatprep.subr.bf16.mxu0 0
    %762 = vmatpush1.bf16.msra.mxu0 %v756
    %763 = vmatprep.subr.bf16.mxu0 0
    %764 = vmatpush1.bf16.msra.mxu0 0
    %765 = vmatprep.subr.bf16.mxu0 0
    %766 = vmatpush1.bf16.msra.mxu0 0
    %767 = vmatprep.subr.bf16.mxu0 0
    %768 = vmatpush1.bf16.msra.mxu0 0
    %769 = vmatprep.subr.bf16.mxu0 0
    %770 = vmatpush1.bf16.msra.mxu0 0
    %771 = vmatprep.subr.bf16.mxu0 0
    %772 = vmatpush1.bf16.msra.mxu0 0
    %773 = vmatprep.subr.bf16.mxu0 0
    %774 = vmatpush1.bf16.msra.mxu0 0
    %775 = vmatprep.subr.bf16.mxu0 0
    %776 = vmatpush1.bf16.msra.mxu0 0
    %777 = vmatprep.subr.bf16.mxu0 0
    %778 = vmatpush1.bf16.msra.mxu0 0
    %779 = vmatprep.subr.bf16.mxu0 0
    %780 = vmatpush1.bf16.msra.mxu0 0
    %781 = vmatprep.subr.bf16.mxu0 0
    %782 = vmatpush1.bf16.msra.mxu0 0
    %783 = vmatprep.subr.bf16.mxu0 0
    %784 = vmatpush1.bf16.msra.mxu0 0
    %785 = vmatprep.subr.bf16.mxu0 0
    %786 = vmatpush1.bf16.msra.mxu0 0
    %787 = vmatprep.subr.bf16.mxu0 0
    %788 = vmatpush1.bf16.msra.mxu0 0
    %789 = vmatprep.subr.bf16.mxu0 0
    %790 = vmatpush1.bf16.msra.mxu0 0
    %791 = vmatprep.subr.bf16.mxu0 0
    %792 = vmatpush1.bf16.msra.mxu0 0
    %793 = vmatprep.mubr.bf16.mxu0 0
    %794 = vmatmul.mubr.bf16.gmra.mrb[0].mxu0 %v759
    %v795 = vpop.f32.mrb[0].mxu0
    %v796 = vadd.f32 0.0, %v795
    %v797 = vpop.f32.mrb[0].mxu0
    %v798 = vpop.f32.mrb[0].mxu0
    %v799 = vadd.f32 0.0, %v798
    %v800 = vpop.f32.mrb[0].mxu0
    %801 = vdwg.mxu0
    %804 = vrot.lane.b32.xlu0 %v702, 16
    %v805 = vpop.permute.xlu0 %804
    %806 = vrot.lane.b32.xlu0 %v705, 16
    %v807 = vpop.permute.xlu0 %806
    %812 = vrot.lane.b32.xlu0 %v749, 32
    %v813 = vpop.permute.xlu0 %812
    %814 = vrot.lane.b32.xlu0 %v752, 32
    %v815 = vpop.permute.xlu0 %814
    %820 = vrot.lane.b32.xlu0 %v796, 48
    %v821 = vpop.permute.xlu0 %820
    %822 = vrot.lane.b32.xlu0 %v799, 48
    %v823 = vpop.permute.xlu0 %822
    %v826 = vsel %vm324, %v655, %v805
    %v827 = vsel %vm324, %v658, %v807
    %vm828 = vcmask 261120
    %v829 = vsel %vm828, %v826, %v813
    %v830 = vsel %vm828, %v827, %v815
    %vm831 = vcmask 392192
    %v832 = vsel %vm831, %v829, %v821
    %v833 = vsel %vm831, %v830, %v823
    %834 = vst.msk [vmem:[#allocation2] sm:$0xff] %vm75, %v832
    %835 = vst.msk [vmem:[#allocation2 + $0x8] sm:$0xff] %vm75, %v833
    // Predicated region
    $region14: #{tpu_custom_call.1} parent=1 // pred_check
      _
    $region15: #{tpu_custom_call.1} parent=1 // pred_check_branch
      %837 = sbr.rel (0) target = $region17
    $region16: #{tpu_custom_call.1} parent=1 // pred_region
      %s839 = ssub.s32 256, 256
      %840 = vsyncadd [#allocation3], %s839
      %s841 = sshll.u32 [#allocation2], 4
      %s842 = int_to_ptr.vmem [resolvable:$true] %s841
      %847 = dma.vmem_to_hbm [thread:$0]  %s842, 256, %s3, [#allocation3], 128, 128, 8
    $region17: #{tpu_custom_call.1} parent=1 // pred_fallthru
      _
    // Predicated region
    $region18: #{tpu_custom_call.1} parent=1 // pred_check
      _
    $region19: #{tpu_custom_call.1} parent=1 // pred_check_branch
      %849 = sbr.rel (0) target = $region21
    $region20: #{tpu_custom_call.1} parent=1 // pred_region
      %850 = dma.done [#allocation3], 256
    $region21: #{tpu_custom_call.1} parent=1 // pred_fallthru
      _
    %851 = vsyncpa [#allocation3], 1

</llo_original>
